<compile_context>
chip_gen: v5e
topology: v5e:2x2
jax: 0.10.0
libtpu: 0.0.40
codegen_flags: <defaults>
</compile_context>

<pallas_src>
import math
import jax
import jax.numpy as jnp
from jax import lax
from jax.experimental import pallas as pl
from jax.experimental.pallas import tpu as pltpu

LN_EPS = 1e-5     # nn.LayerNorm default eps
GATE_EPS = 1e-6   # self.eps in the module

# On v7x at production H (>= 2048) set this True so never-changing weight/param
# blocks are single-buffered (pipeline_mode=pl.Buffered(1)); default
# double-buffering would blow past v7x's 64 MiB VMEM (W_h alone is 32 MiB at
# H=2048 bf16).  Left False for the demo: the blocks are tiny, they are only
# DMA'd once either way (constant block index), and the default path is the
# most portable configuration.
SINGLE_BUFFER_CONSTANTS = False


# ----------------------------- kernel-side math -----------------------------

def _layer_norm(v, gamma, beta):
    # Two-pass statistics (matches the PyTorch nn.LayerNorm formulation).
    mu = jnp.mean(v, axis=-1, keepdims=True)
    var = jnp.mean((v - mu) * (v - mu), axis=-1, keepdims=True)
    return (v - mu) * jax.lax.rsqrt(var + LN_EPS) * gamma + beta


def _normalized_exp_gate(pre):
    centered = pre - jnp.mean(pre, axis=1, keepdims=True)
    exp_val = jnp.exp(jnp.clip(centered, -5.0, 5.0))
    # Per-row reciprocal ((B,1)) + broadcast multiply instead of a (B,H) divide.
    inv_norm = 1.0 / (jnp.sum(exp_val, axis=1, keepdims=True) + GATE_EPS)
    return exp_val * inv_norm


# ------------------------- pass 1: x-path (parallel) -------------------------

def gates_x_kernel(x_ref, wx_ref, px_ref, gx_ref):
    """gates_x = LayerNorm(x @ W_x + b_x) for a tile of (T*B) rows."""
    p = px_ref[...]                                   # (3, 4H): b_x, ln_in g, ln_in b
    acts = jnp.dot(x_ref[...], wx_ref[...],
                   preferred_element_type=jnp.float32) + p[0:1]
    gx_ref[...] = _layer_norm(acts, p[1:2], p[2:3])


# ----------------------- pass 2: recurrence (sequential) ---------------------

def slstm_recurrent_kernel(gx_ref, h0_ref, c0_ref, wh_ref, p4_ref, ph_ref,
                           h_out_ref, c_out_ref, h_scr, c_scr):
    tc = pl.program_id(1)                 # timestep-chunk index ("arbitrary")
    H = h0_ref.shape[1]
    n_steps = gx_ref.shape[0]             # T_CHUNK (static)

    # Initialize the carry from h0/c0 at the start of each batch tile's sweep.
    @pl.when(tc == 0)
    def _init():
        h_scr[...] = h0_ref[...]
        c_scr[...] = c0_ref[...]

    # VMEM-resident across every step (constant index maps).
    wh = wh_ref[...]                       # (H, 4H) bf16
    p4 = p4_ref[...]                       # (3, 4H) f32
    b_h, g_hu, b_hu = p4[0:1], p4[1:2], p4[2:3]
    ph = ph_ref[...]                       # (4, H) f32
    g_c, b_c, g_hn, b_hn = ph[0:1], ph[1:2], ph[2:3], ph[3:4]

    def step(s, carry):
        h_prev, c_prev = carry
        gates_x = gx_ref[s]                                      # (B, 4H) f32
        gates_h = jnp.dot(h_prev.astype(jnp.bfloat16), wh,
                          preferred_element_type=jnp.float32) + b_h
        gates_h = _layer_norm(gates_h, g_hu, b_hu)
        gates = gates_x + gates_h

        # chunk(4, dim=1): H is a multiple of 128 -> lane-aligned slices.
        i = _normalized_exp_gate(gates[:, 0 * H:1 * H])
        f = _normalized_exp_gate(gates[:, 1 * H:2 * H])
        g = gates[:, 2 * H:3 * H]
        o = gates[:, 3 * H:4 * H]

        # One reciprocal shared by the i/f renormalization.
        inv_gate_sum = 1.0 / (i + f + GATE_EPS)
        i = i * inv_gate_sum
        f = f * inv_gate_sum

        c = f * c_prev + i * jnp.tanh(g)
        c = _layer_norm(c, g_c, b_c)
        h = jax.nn.sigmoid(o) * _layer_norm(jnp.tanh(c), g_hn, b_hn)
        return h, c

    h, c = lax.fori_loop(0, n_steps, step, (h_scr[...], c_scr[...]),
                         unroll=True)
    h_scr[...] = h
    c_scr[...] = c

    # Materialize the outputs only on the last chunk of this batch tile.
    @pl.when(tc == pl.num_programs(1) - 1)
    def _finalize():
        h_out_ref[...] = h
        c_out_ref[...] = c


# --------------------------------- helpers -----------------------------------

def _const_spec(shape, grid_ndim):
    """BlockSpec for an operand that is identical at every grid step."""
    zeros = (0,) * len(shape)
    kwargs = {}
    if SINGLE_BUFFER_CONSTANTS:
        kwargs["pipeline_mode"] = pl.Buffered(1)
    imap = (lambda i: zeros) if grid_ndim == 1 else (lambda i, j: zeros)
    return pl.BlockSpec(shape, imap, **kwargs)


def _largest_divisor_leq(n, cap):
    for d in range(min(n, cap), 0, -1):
        if n % d == 0:
            return d
    return 1


def _row_tile(rows, max_tile=512):
    if rows <= max_tile:
        return rows
    for cand in range(max_tile - max_tile % 8, 7, -8):
        if rows % cand == 0:
            return cand
    return rows


def _vmem_limit_bytes(resident_bytes):
    """Generation-aware VMEM limit: 2x the resident footprint + headroom,
    capped at ~7/8 of the chip's physical VMEM (64 MiB assumed if unknown)."""
    phys = 64 * 1024 * 1024
    try:
        phys = int(pltpu.get_tpu_info().vmem_capacity_bytes)
    except Exception:
        pass
    want = max(32 * 1024 * 1024, 2 * int(resident_bytes) + (8 << 20))
    return int(min(want, (phys * 7) // 8))


# --------------------------------- wrapper -----------------------------------

def slstm_forward(x_seq, h0, c0, params, *, t_chunk=None, batch_tiles=None):
    """Runs the sLSTM cell over a whole sequence.

    x_seq: (T, B, input_size) f32; h0/c0: (B, H) f32.  Returns the final (h, c)
    -- identical to calling the module forward T times feeding outputs back.
    """
    T, B, I = x_seq.shape
    H = h0.shape[1]
    H4 = 4 * H

    if T == 0:                       # degenerate sequence: state unchanged
        return h0, c0

    # bf16 MXU operands (cast once at the boundary), f32 params elsewhere.
    wx = params['wx'].astype(jnp.bfloat16)
    wh = params['wh'].astype(jnp.bfloat16)
    px_pack = jnp.stack([params['bx'], params['ln_in_g'], params['ln_in_b']])   # (3,4H)
    p4_pack = jnp.stack([params['bh'], params['ln_hu_g'], params['ln_hu_b']])   # (3,4H)
    ph_pack = jnp.stack([params['ln_c_g'], params['ln_c_b'],
                         params['ln_h_g'], params['ln_h_b']])                   # (4,H)

    f32b, bf16b = 4, 2

    # ---------------- pass 1: all-timestep x-path matmul + LN ----------------
    rows = T * B
    rt = _row_tile(rows)
    x2d = x_seq.reshape(rows, I).astype(jnp.bfloat16)
    gx_resident = (2 * rt * I * bf16b + 2 * I * H4 * bf16b
                   + 2 * 8 * H4 * f32b + 2 * rt * H4 * f32b)
    gates_x = pl.pallas_call(
        gates_x_kernel,
        grid=(rows // rt,),
        out_shape=jax.ShapeDtypeStruct((rows, H4), jnp.float32),
        in_specs=[pl.BlockSpec((rt, I), lambda r: (r, 0)),
                  _const_spec((I, H4), 1),
                  _const_spec((3, H4), 1)],
        out_specs=pl.BlockSpec((rt, H4), lambda r: (r, 0)),
        compiler_params=pltpu.CompilerParams(
            dimension_semantics=("parallel",),
            vmem_limit_bytes=_vmem_limit_bytes(gx_resident)),
    )(x2d, wx, px_pack)
    gates_x = gates_x.reshape(T, B, H4)

    # ---------------- pass 2: the serial recurrence over h, c ----------------
    t_chunk = t_chunk or _largest_divisor_leq(T, 8)
    n_tc = T // t_chunk
    n_b = batch_tiles or (2 if B % 16 == 0 else 1)   # v7x: 2 TCs take half-batch each
    assert B % n_b == 0
    b_tile = B // n_b

    recur_resident = (2 * t_chunk * b_tile * H4 * f32b       # gates_x stream
                      + 2 * 2 * b_tile * H * f32b            # h0, c0
                      + 2 * H * H4 * bf16b                   # W_h
                      + 2 * 8 * H4 * f32b + 2 * 8 * H * f32b  # packed params
                      + 2 * 2 * b_tile * H * f32b            # outputs
                      + 2 * b_tile * H * f32b)               # carry scratch

    h, c = pl.pallas_call(
        slstm_recurrent_kernel,
        grid=(n_b, n_tc),
        out_shape=(jax.ShapeDtypeStruct((B, H), jnp.float32),
                   jax.ShapeDtypeStruct((B, H), jnp.float32)),
        in_specs=[
            pl.BlockSpec((t_chunk, b_tile, H4), lambda b, t: (t, b, 0)),
            pl.BlockSpec((b_tile, H), lambda b, t: (b, 0)),
            pl.BlockSpec((b_tile, H), lambda b, t: (b, 0)),
            _const_spec((H, H4), 2),
            _const_spec((3, H4), 2),
            _const_spec((4, H), 2),
        ],
        out_specs=(pl.BlockSpec((b_tile, H), lambda b, t: (b, 0)),
                   pl.BlockSpec((b_tile, H), lambda b, t: (b, 0))),
        scratch_shapes=[pltpu.VMEM((b_tile, H), jnp.float32),
                        pltpu.VMEM((b_tile, H), jnp.float32)],
        compiler_params=pltpu.CompilerParams(
            dimension_semantics=("parallel", "arbitrary"),
            vmem_limit_bytes=_vmem_limit_bytes(recur_resident)),
    )(gates_x, h0, c0, wh, p4_pack, ph_pack)
    return h, c


# ------------------------------ params & reference ---------------------------

def init_params(key, input_size, hidden_size):
    """Mirrors sLSTMCell.reset_parameters: every parameter ~ U(-std, std),
    std = 1/sqrt(hidden_size).  All parameters are stored f32 (module parity);
    the wrapper casts the weight matrices / x to bf16 at the MXU boundary."""
    std = 1.0 / math.sqrt(hidden_size)
    H4 = 4 * hidden_size
    ks = jax.random.split(key, 12)
    u = lambda k, shape: jax.random.uniform(k, shape, jnp.float32, -std, std)
    return dict(
        wx=u(ks[0], (input_size, H4)),          # input_weights.weight^T
        bx=u(ks[1], (H4,)),
        wh=u(ks[2], (hidden_size, H4)),         # hidden_weights.weight^T
        bh=u(ks[3], (H4,)),
        ln_in_g=u(ks[4], (H4,)), ln_in_b=u(ks[5], (H4,)),
        ln_hu_g=u(ks[6], (H4,)), ln_hu_b=u(ks[7], (H4,)),
        ln_c_g=u(ks[8], (hidden_size,)), ln_c_b=u(ks[9], (hidden_size,)),
        ln_h_g=u(ks[10], (hidden_size,)), ln_h_b=u(ks[11], (hidden_size,)),
    )


def _layer_norm_ref(v, gamma, beta):
    mu = jnp.mean(v, axis=-1, keepdims=True)
    var = jnp.mean((v - mu) ** 2, axis=-1, keepdims=True)
    return (v - mu) * jax.lax.rsqrt(var + LN_EPS) * gamma + beta


def _normalized_exp_gate_ref(pre):
    centered = pre - jnp.mean(pre, axis=1, keepdims=True)
    exp_val = jnp.exp(jnp.clip(centered, -5.0, 5.0))
    normalizer = jnp.sum(exp_val, axis=1, keepdims=True) + GATE_EPS
    return exp_val / normalizer


def reference_step(x, h_prev, c_prev, p):
    """Pure-JAX single-step reference mirroring sLSTMCell.forward (dropout=0);
    matmul operands cast to bf16 (f32 accumulation) to match the kernel's MXU
    numerics, everything else f32 with plain divides / two-pass LayerNorm."""
    H = h_prev.shape[1]
    gx = jnp.dot(x.astype(jnp.bfloat16), p['wx'].astype(jnp.bfloat16),
                 preferred_element_type=jnp.float32) + p['bx']
    gh = jnp.dot(h_prev.astype(jnp.bfloat16), p['wh'].astype(jnp.bfloat16),
                 preferred_element_type=jnp.float32) + p['bh']
    gx = _layer_norm_ref(gx, p['ln_in_g'], p['ln_in_b'])
    gh = _layer_norm_ref(gh, p['ln_hu_g'], p['ln_hu_b'])
    gates = gx + gh
    i, f, g, o = (gates[:, k * H:(k + 1) * H] for k in range(4))
    i = _normalized_exp_gate_ref(i)
    f = _normalized_exp_gate_ref(f)
    gate_sum = i + f
    i = i / (gate_sum + GATE_EPS)
    f = f / (gate_sum + GATE_EPS)
    c = f * c_prev + i * jnp.tanh(g)
    c = _layer_norm_ref(c, p['ln_c_g'], p['ln_c_b'])
    h = jax.nn.sigmoid(o) * _layer_norm_ref(jnp.tanh(c), p['ln_h_g'], p['ln_h_b'])
    return h, c


# ----------------------------------- demo ------------------------------------

if __name__ == "__main__":
    input_size = 64
    hidden_size = 128   # multiple of 128 -> lane-aligned gate slices & outputs
    batch = 8           # one sublane group
    seq_len = 8         # 8 timesteps processed inside ONE recurrent grid step

    key = jax.random.PRNGKey(0)
    k_x, k_h, k_c, k_p = jax.random.split(key, 4)
    x_seq = jax.random.normal(k_x, (seq_len, batch, input_size), jnp.float32)
    h0 = jax.random.normal(k_h, (batch, hidden_size), jnp.float32)
    c0 = jax.random.normal(k_c, (batch, hidden_size), jnp.float32)
    params = init_params(k_p, input_size, hidden_size)

    h_out, c_out = slstm_forward(x_seq, h0, c0, params)
    jax.block_until_ready((h_out, c_out))

    # Reference: apply the single-step cell seq_len times.
    h_ref, c_ref = h0, c0
    for t in range(seq_len):
        h_ref, c_ref = reference_step(x_seq[t], h_ref, c_ref, params)

    err_h = float(jnp.max(jnp.abs(h_out - h_ref)))
    err_c = float(jnp.max(jnp.abs(c_out - c_ref)))
    assert err_h < 1e-4 and err_c < 1e-4, (err_h, err_c)

    print("KERNEL_OK")
</pallas_src>

<mosaic_0001>
module attributes {stable_mosaic.version = 11 : i64} {
  func.func @gates_x_kernel(%arg0: i32, %arg1: memref<64x64xbf16, #tpu.memory_space<vmem>>, %arg2: memref<64x512xbf16, #tpu.memory_space<vmem>>, %arg3: memref<3x512xf32, #tpu.memory_space<vmem>>, %arg4: memref<64x512xf32, #tpu.memory_space<vmem>>) attributes {dimension_semantics = [#tpu.dimension_semantics<parallel>], iteration_bounds = array<i64: 1>, scalar_prefetch = 0 : i64, scratch_operands = 0 : i64, tpu.core_type = #tpu.core_type<tc>, window_params = [{transform_indices = @transform_0, window_bounds = array<i64: 64, 64>}, {pipeline_mode = #tpu.pipeline_mode<synchronous>, transform_indices = @transform_1, window_bounds = array<i64: 64, 512>}, {pipeline_mode = #tpu.pipeline_mode<synchronous>, transform_indices = @transform_2, window_bounds = array<i64: 3, 512>}, {transform_indices = @transform_3, window_bounds = array<i64: 64, 512>}]} {
    %c0 = arith.constant 0 : index
    %c0_0 = arith.constant 0 : index
    %0 = vector.load %arg3[%c0, %c0_0] : memref<3x512xf32, #tpu.memory_space<vmem>>, vector<3x512xf32>
    %c0_1 = arith.constant 0 : index
    %c0_2 = arith.constant 0 : index
    %1 = vector.load %arg1[%c0_1, %c0_2] : memref<64x64xbf16, #tpu.memory_space<vmem>>, vector<64x64xbf16>
    %c0_3 = arith.constant 0 : index
    %c0_4 = arith.constant 0 : index
    %2 = vector.load %arg2[%c0_3, %c0_4] : memref<64x512xbf16, #tpu.memory_space<vmem>>, vector<64x512xbf16>
    %cst = arith.constant dense<0.000000e+00> : vector<64x512xf32>
    %3 = tpu.matmul %1, %2, %cst {dimension_numbers = #tpu.dot_dimension_numbers<[1], [0], [0], [1], [0, 0, 1, 1], [], []>} : vector<64x64xbf16>, vector<64x512xbf16>, vector<64x512xf32> -> vector<64x512xf32>
    %4 = vector.extract_strided_slice %0 {offsets = [0, 0], sizes = [1, 512], strides = [1, 1]} : vector<3x512xf32> to vector<1x512xf32>
    %5 = vector.broadcast %4 : vector<1x512xf32> to vector<64x512xf32>
    %6 = arith.addf %3, %5 : vector<64x512xf32>
    %7 = vector.extract_strided_slice %0 {offsets = [1, 0], sizes = [1, 512], strides = [1, 1]} : vector<3x512xf32> to vector<1x512xf32>
    %8 = vector.extract_strided_slice %0 {offsets = [2, 0], sizes = [1, 512], strides = [1, 1]} : vector<3x512xf32> to vector<1x512xf32>
    %cst_5 = arith.constant dense<0.000000e+00> : vector<64xf32>
    %9 = vector.multi_reduction <add>, %6, %cst_5 [1] : vector<64x512xf32> to vector<64xf32>
    %10 = vector.shape_cast %9 : vector<64xf32> to vector<64x1xf32>
    %cst_6 = arith.constant 5.120000e+02 : f32
    %11 = vector.broadcast %cst_6 : f32 to vector<64x1xf32>
    %12 = arith.divf %10, %11 : vector<64x1xf32>
    %13 = vector.broadcast %12 : vector<64x1xf32> to vector<64x512xf32>
    %14 = arith.subf %6, %13 : vector<64x512xf32>
    %15 = vector.broadcast %12 : vector<64x1xf32> to vector<64x512xf32>
    %16 = arith.subf %6, %15 : vector<64x512xf32>
    %17 = arith.mulf %14, %16 : vector<64x512xf32>
    %cst_7 = arith.constant dense<0.000000e+00> : vector<64xf32>
    %18 = vector.multi_reduction <add>, %17, %cst_7 [1] : vector<64x512xf32> to vector<64xf32>
    %19 = vector.shape_cast %18 : vector<64xf32> to vector<64x1xf32>
    %cst_8 = arith.constant 5.120000e+02 : f32
    %20 = vector.broadcast %cst_8 : f32 to vector<64x1xf32>
    %21 = arith.divf %19, %20 : vector<64x1xf32>
    %22 = vector.broadcast %12 : vector<64x1xf32> to vector<64x512xf32>
    %23 = arith.subf %6, %22 : vector<64x512xf32>
    %cst_9 = arith.constant 9.99999974E-6 : f32
    %24 = vector.broadcast %cst_9 : f32 to vector<64x1xf32>
    %25 = arith.addf %21, %24 : vector<64x1xf32>
    %26 = math.rsqrt %25 : vector<64x1xf32>
    %27 = vector.broadcast %26 : vector<64x1xf32> to vector<64x512xf32>
    %28 = arith.mulf %23, %27 : vector<64x512xf32>
    %29 = vector.broadcast %7 : vector<1x512xf32> to vector<64x512xf32>
    %30 = arith.mulf %28, %29 : vector<64x512xf32>
    %31 = vector.broadcast %8 : vector<1x512xf32> to vector<64x512xf32>
    %32 = arith.addf %30, %31 : vector<64x512xf32>
    %c0_10 = arith.constant 0 : index
    %c0_11 = arith.constant 0 : index
    %33 = vector.load %arg4[%c0_10, %c0_11] : memref<64x512xf32, #tpu.memory_space<vmem>>, vector<64x512xf32>
    tpu.vector_store %arg4[%c0_10, %c0_11], %32 {strides = array<i32>} : memref<64x512xf32, #tpu.memory_space<vmem>>, vector<64x512xf32>,
    return
  }
  func.func @transform_0(%arg0: i32) -> (i32, i32) {
    %c0_i32 = arith.constant 0 : i32
    %c0_i32_0 = arith.constant 0 : i32
    return %arg0, %c0_i32 : i32, i32
  }
  func.func @transform_1(%arg0: i32) -> (i32, i32) {
    %c0_i32 = arith.constant 0 : i32
    %c0_i32_0 = arith.constant 0 : i32
    %c0_i32_1 = arith.constant 0 : i32
    return %c0_i32, %c0_i32_0 : i32, i32
  }
  func.func @transform_2(%arg0: i32) -> (i32, i32) {
    %c0_i32 = arith.constant 0 : i32
    %c0_i32_0 = arith.constant 0 : i32
    %c0_i32_1 = arith.constant 0 : i32
    return %c0_i32, %c0_i32_0 : i32, i32
  }
  func.func @transform_3(%arg0: i32) -> (i32, i32) {
    %c0_i32 = arith.constant 0 : i32
    %c0_i32_0 = arith.constant 0 : i32
    return %arg0, %c0_i32 : i32, i32
  }
}

</mosaic_0001>

<llo_original>
// kernel: tpu_custom_call.1
$region0: #{tpu_custom_call.1}
  #allocation0 [shape = 'u32[]', space=smem, size = 0x4, offset = 0x4, fixed_abs, tag = 'smem constant byte address 0x4 - core index']
  #allocation1 [shape = 'u32[72,128]{1,0:T(1,128)}', space=vmem, size = 0x9000, scoped, tag = 'internal scratch']
  %s0 = inlined_call_operand.hbm [shape: bf16[64,64], index: 0, kind: input, shape index: {}]
  %s1 = inlined_call_operand.hbm [shape: bf16[64,512], index: 1, kind: input, shape index: {}]
  %s2 = inlined_call_operand.hbm [shape: f32[3,512], index: 2, kind: input, shape index: {}]
  %s3 = inlined_call_operand.hbm [shape: f32[64,512], index: 3, kind: output, shape index: {}]
  %s4 = sld [smem:[#allocation0]]
  $region34: #{tpu_custom_call.1} parent=0
    _
  %s6 = ssub.s32 1, %s4
  %s7 = scalar_select 0, %s6, %s4
  $region1: #{tpu_custom_call.1} parent=0
    #allocation2 [shape = 'u8[16384]{0}', space=vmem, size = 0x4000, scoped, tag = 'input window, operand 0, single buffered']
    #allocation3 [shape = 's32[1]{0}', space=sflag, size = 0x4, scoped, tag = 'scoped memory for tpu_custom_call.1']
    #allocation4 [shape = 's32[1]{0}', space=sflag, size = 0x4, scoped, tag = 'scoped memory for tpu_custom_call.1']
    #allocation5 [shape = 'u8[65536]{0}', space=vmem, size = 0x10000, scoped, tag = 'input window, operand 1, single buffered']
    #allocation6 [shape = 's32[1]{0}', space=sflag, size = 0x4, scoped, tag = 'scoped memory for tpu_custom_call.1']
    #allocation7 [shape = 'u8[8192]{0}', space=vmem, size = 0x2000, scoped, tag = 'input window, operand 2, single buffered']
    #allocation8 [shape = 'u8[131072]{0}', space=vmem, size = 0x20000, scoped, tag = 'output window, operand 0, single buffered']
    %8 = vsyncpa [#allocation3], 0
    %9 = vsyncpa [#allocation6], 0
    %10 = vsyncpa [#allocation4], 0
    // Predicated region
    $region2: #{tpu_custom_call.1} parent=1 // pred_check
      _
    $region3: #{tpu_custom_call.1} parent=1 // pred_check_branch
      %12 = sbr.rel (0) target = $region5
    $region4: #{tpu_custom_call.1} parent=1 // pred_region
      %14 = vsyncadd [#allocation3], 0
      %s15 = sshll.u32 %s0, 4
      %s16 = int_to_ptr.hbm [resolvable:$true] %s15
      %s17 = sshll.u32 [#allocation2], 4
      %s18 = int_to_ptr.vmem [resolvable:$true] %s17
      %23 = dma.hbm_to_vmem [thread:$0]  %s16, 512, %s18, [#allocation3], 64, 64, 4
    $region5: #{tpu_custom_call.1} parent=1 // pred_fallthru
      _
    // Predicated region
    $region6: #{tpu_custom_call.1} parent=1 // pred_check
      _
    $region7: #{tpu_custom_call.1} parent=1 // pred_check_branch
      %25 = sbr.rel (0) target = $region9
    $region8: #{tpu_custom_call.1} parent=1 // pred_region
      %27 = vsyncadd [#allocation6], 0
      %s28 = sshll.u32 %s1, 4
      %s29 = int_to_ptr.hbm [resolvable:$true] %s28
      %s30 = sshll.u32 [#allocation5], 4
      %s31 = int_to_ptr.vmem [resolvable:$true] %s30
      %36 = dma.hbm_to_vmem [thread:$0]  %s29, 2048, %s31, [#allocation6], 256, 256, 16
    $region9: #{tpu_custom_call.1} parent=1 // pred_fallthru
      _
    // Predicated region
    $region10: #{tpu_custom_call.1} parent=1 // pred_check
      _
    $region11: #{tpu_custom_call.1} parent=1 // pred_check_branch
      %38 = sbr.rel (0) target = $region13
    $region12: #{tpu_custom_call.1} parent=1 // pred_region
      %40 = vsyncadd [#allocation6], 0
      %s42 = sshll.u32 %s2, 4
      %s43 = int_to_ptr.hbm [resolvable:$true] %s42
      %s44 = sshll.u32 [#allocation7], 4
      %s45 = int_to_ptr.vmem [resolvable:$true] %s44
      %47 = dma.hbm_to_vmem [thread:$0]  %s43, 256, %s45, [#allocation6]
    $region13: #{tpu_custom_call.1} parent=1 // pred_fallthru
      _
    // Predicated region
    $region14: #{tpu_custom_call.1} parent=1 // pred_check
      _
    $region15: #{tpu_custom_call.1} parent=1 // pred_check_branch
      %49 = sbr.rel (0) target = $region17
    $region16: #{tpu_custom_call.1} parent=1 // pred_region
      %51 = dma.done [#allocation3], 512
    $region17: #{tpu_custom_call.1} parent=1 // pred_fallthru
      _
    // Predicated region
    $region18: #{tpu_custom_call.1} parent=1 // pred_check
      _
    $region19: #{tpu_custom_call.1} parent=1 // pred_check_branch
      %53 = sbr.rel (0) target = $region21
    $region20: #{tpu_custom_call.1} parent=1 // pred_region
      %55 = dma.done [#allocation6], 2048
    $region21: #{tpu_custom_call.1} parent=1 // pred_fallthru
      _
    // Predicated region
    $region22: #{tpu_custom_call.1} parent=1 // pred_check
      _
    $region23: #{tpu_custom_call.1} parent=1 // pred_check_branch
      %57 = sbr.rel (0) target = $region25
    $region24: #{tpu_custom_call.1} parent=1 // pred_region
      %59 = dma.done [#allocation6], 256
    $region25: #{tpu_custom_call.1} parent=1 // pred_fallthru
      _
    %v61 = vld [vmem:[#allocation7] sm:$0x77]
    %v62 = vld [vmem:[#allocation7 + $0x8] sm:$0x77]
    %v63 = vld [vmem:[#allocation2] sm:$0xf]
    %v64 = vld [vmem:[#allocation2 + $0x4] sm:$0xf]
    %v65 = vld [vmem:[#allocation2 + $0x8] sm:$0xf]
    %v66 = vld [vmem:[#allocation2 + $0xc] sm:$0xf]
    %v67 = vld [vmem:[#allocation2 + $0x10] sm:$0xf]
    %v68 = vld [vmem:[#allocation2 + $0x14] sm:$0xf]
    %v69 = vld [vmem:[#allocation2 + $0x18] sm:$0xf]
    %v70 = vld [vmem:[#allocation2 + $0x1c] sm:$0xf]
    %v71 = vld [vmem:[#allocation5] sm:$0xff]
    %v72 = vld [vmem:[#allocation5 + $0x8] sm:$0xff]
    %v73 = vld [vmem:[#allocation5 + $0x10] sm:$0xff]
    %v74 = vld [vmem:[#allocation5 + $0x18] sm:$0xff]
    %v75 = vld [vmem:[#allocation5 + $0x20] sm:$0xff]
    %v76 = vld [vmem:[#allocation5 + $0x28] sm:$0xff]
    %v77 = vld [vmem:[#allocation5 + $0x30] sm:$0xff]
    %v78 = vld [vmem:[#allocation5 + $0x38] sm:$0xff]
    %v79 = vld [vmem:[#allocation5 + $0x40] sm:$0xff]
    %v80 = vld [vmem:[#allocation5 + $0x48] sm:$0xff]
    %v81 = vld [vmem:[#allocation5 + $0x50] sm:$0xff]
    %v82 = vld [vmem:[#allocation5 + $0x58] sm:$0xff]
    %v83 = vld [vmem:[#allocation5 + $0x60] sm:$0xff]
    %v84 = vld [vmem:[#allocation5 + $0x68] sm:$0xff]
    %v85 = vld [vmem:[#allocation5 + $0x70] sm:$0xff]
    %v86 = vld [vmem:[#allocation5 + $0x78] sm:$0xff]
    %v89 = vperm.slane %v61, 0
    %v90 = vperm.slane %v61, 4
    %v91 = vperm.slane %v62, 0
    %v92 = vperm.slane %v62, 4
    %v97 = vperm.slane %v89, 0
    %v98 = vperm.slane %v90, 0
    %v99 = vperm.slane %v91, 0
    %v100 = vperm.slane %v92, 0
    %v109 = vunpack.c.l.b16 %v63
    %v110 = vunpack.c.l.b16 %v64
    %v111 = vunpack.c.l.b16 %v65
    %v112 = vunpack.c.l.b16 %v66
    %v113 = vunpack.c.l.b16 %v67
    %v114 = vunpack.c.l.b16 %v68
    %v115 = vunpack.c.l.b16 %v69
    %v116 = vunpack.c.l.b16 %v70
    %v117 = vpack.c.b16 %v110, %v109
    %v118 = vpack.c.b16 %v112, %v111
    %v119 = vpack.c.b16 %v114, %v113
    %v120 = vpack.c.b16 %v116, %v115
    %v137 = vunpack.c.l.b16 %v71
    %v138 = vunpack.c.h.b16 %v71
    %v139 = vunpack.c.l.b16 %v72
    %v140 = vunpack.c.h.b16 %v72
    %v141 = vunpack.c.l.b16 %v73
    %v142 = vunpack.c.h.b16 %v73
    %v143 = vunpack.c.l.b16 %v74
    %v144 = vunpack.c.h.b16 %v74
    %v145 = vunpack.c.l.b16 %v75
    %v146 = vunpack.c.h.b16 %v75
    %v147 = vunpack.c.l.b16 %v76
    %v148 = vunpack.c.h.b16 %v76
    %v149 = vunpack.c.l.b16 %v77
    %v150 = vunpack.c.h.b16 %v77
    %v151 = vunpack.c.l.b16 %v78
    %v152 = vunpack.c.h.b16 %v78
    %v153 = vunpack.c.l.b16 %v79
    %v154 = vunpack.c.h.b16 %v79
    %v155 = vunpack.c.l.b16 %v80
    %v156 = vunpack.c.h.b16 %v80
    %v157 = vunpack.c.l.b16 %v81
    %v158 = vunpack.c.h.b16 %v81
    %v159 = vunpack.c.l.b16 %v82
    %v160 = vunpack.c.h.b16 %v82
    %v161 = vunpack.c.l.b16 %v83
    %v162 = vunpack.c.h.b16 %v83
    %v163 = vunpack.c.l.b16 %v84
    %v164 = vunpack.c.h.b16 %v84
    %v165 = vunpack.c.l.b16 %v85
    %v166 = vunpack.c.h.b16 %v85
    %v167 = vunpack.c.l.b16 %v86
    %v168 = vunpack.c.h.b16 %v86
    %v169 = vpack.c.b16 %v141, %v137
    %v170 = vpack.c.b16 %v142, %v138
    %v171 = vpack.c.b16 %v143, %v139
    %v172 = vpack.c.b16 %v144, %v140
    %v173 = vpack.c.b16 %v149, %v145
    %v174 = vpack.c.b16 %v150, %v146
    %v175 = vpack.c.b16 %v151, %v147
    %v176 = vpack.c.b16 %v152, %v148
    %v177 = vpack.c.b16 %v157, %v153
    %v178 = vpack.c.b16 %v158, %v154
    %v179 = vpack.c.b16 %v159, %v155
    %v180 = vpack.c.b16 %v160, %v156
    %v181 = vpack.c.b16 %v165, %v161
    %v182 = vpack.c.b16 %v166, %v162
    %v183 = vpack.c.b16 %v167, %v163
    %v184 = vpack.c.b16 %v168, %v164
    %vm201 = vcmask 523264
    %v203 = vsel %vm201, %v117, 0
    %v206 = vsel %vm201, %v118, 0
    %v209 = vsel %vm201, %v119, 0
    %v212 = vsel %vm201, %v120, 0
    %214 = vmatpush.bf16.msra.mxu0 0
    %215 = vmatpush.bf16.msra.mxu0 0
    %216 = vmatpush.bf16.msra.mxu0 0
    %217 = vmatpush.bf16.msra.mxu0 0
    %218 = vmatpush.bf16.msra.mxu0 %v181
    %219 = vmatpush.bf16.msra.mxu0 %v177
    %220 = vmatpush.bf16.msra.mxu0 %v173
    %221 = vmatpush.bf16.msra.mxu0 %v169
    %222 = vmatmul.bf16.gmra.mxu0 %v203
    %v223 = vpop.f32.mrf.mxu0
    %v224 = vadd.f32 %v97, %v223
    %v225 = vpop.f32.mrf.mxu0
    %v226 = vadd.f32 %v97, %v225
    %227 = vmatmul.bf16.gmra.mxu0 %v206
    %v228 = vpop.f32.mrf.mxu0
    %v229 = vadd.f32 %v97, %v228
    %v230 = vpop.f32.mrf.mxu0
    %v231 = vadd.f32 %v97, %v230
    %232 = vmatmul.bf16.gmra.mxu0 %v209
    %v233 = vpop.f32.mrf.mxu0
    %v234 = vadd.f32 %v97, %v233
    %v235 = vpop.f32.mrf.mxu0
    %v236 = vadd.f32 %v97, %v235
    %237 = vmatmul.bf16.gmra.mxu0 %v212
    %v238 = vpop.f32.mrf.mxu0
    %v239 = vadd.f32 %v97, %v238
    %v240 = vpop.f32.mrf.mxu0
    %v241 = vadd.f32 %v97, %v240
    %242 = vdwg.mxu0
    %243 = vmatpush.bf16.msra.mxu0 0
    %244 = vmatpush.bf16.msra.mxu0 0
    %245 = vmatpush.bf16.msra.mxu0 0
    %246 = vmatpush.bf16.msra.mxu0 0
    %247 = vmatpush.bf16.msra.mxu0 %v182
    %248 = vmatpush.bf16.msra.mxu0 %v178
    %249 = vmatpush.bf16.msra.mxu0 %v174
    %250 = vmatpush.bf16.msra.mxu0 %v170
    %251 = vmatmul.bf16.gmra.mxu0 %v203
    %v252 = vpop.f32.mrf.mxu0
    %v253 = vadd.f32 %v98, %v252
    %v254 = vpop.f32.mrf.mxu0
    %v255 = vadd.f32 %v98, %v254
    %256 = vmatmul.bf16.gmra.mxu0 %v206
    %v257 = vpop.f32.mrf.mxu0
    %v258 = vadd.f32 %v98, %v257
    %v259 = vpop.f32.mrf.mxu0
    %v260 = vadd.f32 %v98, %v259
    %261 = vmatmul.bf16.gmra.mxu0 %v209
    %v262 = vpop.f32.mrf.mxu0
    %v263 = vadd.f32 %v98, %v262
    %v264 = vpop.f32.mrf.mxu0
    %v265 = vadd.f32 %v98, %v264
    %266 = vmatmul.bf16.gmra.mxu0 %v212
    %v267 = vpop.f32.mrf.mxu0
    %v268 = vadd.f32 %v98, %v267
    %v269 = vpop.f32.mrf.mxu0
    %v270 = vadd.f32 %v98, %v269
    %271 = vdwg.mxu0
    %272 = vmatpush.bf16.msra.mxu0 0
    %273 = vmatpush.bf16.msra.mxu0 0
    %274 = vmatpush.bf16.msra.mxu0 0
    %275 = vmatpush.bf16.msra.mxu0 0
    %276 = vmatpush.bf16.msra.mxu0 %v183
    %277 = vmatpush.bf16.msra.mxu0 %v179
    %278 = vmatpush.bf16.msra.mxu0 %v175
    %279 = vmatpush.bf16.msra.mxu0 %v171
    %280 = vmatmul.bf16.gmra.mxu0 %v203
    %v281 = vpop.f32.mrf.mxu0
    %v282 = vadd.f32 %v99, %v281
    %v283 = vpop.f32.mrf.mxu0
    %v284 = vadd.f32 %v99, %v283
    %285 = vmatmul.bf16.gmra.mxu0 %v206
    %v286 = vpop.f32.mrf.mxu0
    %v287 = vadd.f32 %v99, %v286
    %v288 = vpop.f32.mrf.mxu0
    %v289 = vadd.f32 %v99, %v288
    %290 = vmatmul.bf16.gmra.mxu0 %v209
    %v291 = vpop.f32.mrf.mxu0
    %v292 = vadd.f32 %v99, %v291
    %v293 = vpop.f32.mrf.mxu0
    %v294 = vadd.f32 %v99, %v293
    %295 = vmatmul.bf16.gmra.mxu0 %v212
    %v296 = vpop.f32.mrf.mxu0
    %v297 = vadd.f32 %v99, %v296
    %v298 = vpop.f32.mrf.mxu0
    %v299 = vadd.f32 %v99, %v298
    %300 = vdwg.mxu0
    %301 = vmatpush.bf16.msra.mxu0 0
    %302 = vmatpush.bf16.msra.mxu0 0
    %303 = vmatpush.bf16.msra.mxu0 0
    %304 = vmatpush.bf16.msra.mxu0 0
    %305 = vmatpush.bf16.msra.mxu0 %v184
    %306 = vmatpush.bf16.msra.mxu0 %v180
    %307 = vmatpush.bf16.msra.mxu0 %v176
    %308 = vmatpush.bf16.msra.mxu0 %v172
    %309 = vmatmul.bf16.gmra.mxu0 %v203
    %v310 = vpop.f32.mrf.mxu0
    %v311 = vadd.f32 %v100, %v310
    %v312 = vpop.f32.mrf.mxu0
    %v313 = vadd.f32 %v100, %v312
    %314 = vmatmul.bf16.gmra.mxu0 %v206
    %v315 = vpop.f32.mrf.mxu0
    %v316 = vadd.f32 %v100, %v315
    %v317 = vpop.f32.mrf.mxu0
    %v318 = vadd.f32 %v100, %v317
    %319 = vmatmul.bf16.gmra.mxu0 %v209
    %v320 = vpop.f32.mrf.mxu0
    %v321 = vadd.f32 %v100, %v320
    %v322 = vpop.f32.mrf.mxu0
    %v323 = vadd.f32 %v100, %v322
    %324 = vmatmul.bf16.gmra.mxu0 %v212
    %v325 = vpop.f32.mrf.mxu0
    %v326 = vadd.f32 %v100, %v325
    %v327 = vpop.f32.mrf.mxu0
    %v328 = vadd.f32 %v100, %v327
    %329 = vdwg.mxu0
    %v330 = vadd.f32 %v224, %v253
    %v331 = vadd.f32 %v330, %v282
    %v332 = vadd.f32 %v331, %v311
    %333 = vadd.xlane.f32.xlu0 %v332
    %v334 = vpop.xlane.xlu0 %333
    %v335 = vadd.f32 %v226, %v255
    %v336 = vadd.f32 %v335, %v284
    %v337 = vadd.f32 %v336, %v313
    %338 = vadd.xlane.f32.xlu0 %v337
    %v339 = vpop.xlane.xlu0 %338
    %v340 = vadd.f32 %v229, %v258
    %v341 = vadd.f32 %v340, %v287
    %v342 = vadd.f32 %v341, %v316
    %343 = vadd.xlane.f32.xlu0 %v342
    %v344 = vpop.xlane.xlu0 %343
    %v345 = vadd.f32 %v231, %v260
    %v346 = vadd.f32 %v345, %v289
    %v347 = vadd.f32 %v346, %v318
    %348 = vadd.xlane.f32.xlu0 %v347
    %v349 = vpop.xlane.xlu0 %348
    %v350 = vadd.f32 %v234, %v263
    %v351 = vadd.f32 %v350, %v292
    %v352 = vadd.f32 %v351, %v321
    %353 = vadd.xlane.f32.xlu0 %v352
    %v354 = vpop.xlane.xlu0 %353
    %v355 = vadd.f32 %v236, %v265
    %v356 = vadd.f32 %v355, %v294
    %v357 = vadd.f32 %v356, %v323
    %358 = vadd.xlane.f32.xlu0 %v357
    %v359 = vpop.xlane.xlu0 %358
    %v360 = vadd.f32 %v239, %v268
    %v361 = vadd.f32 %v360, %v297
    %v362 = vadd.f32 %v361, %v326
    %363 = vadd.xlane.f32.xlu0 %v362
    %v364 = vpop.xlane.xlu0 %363
    %v365 = vadd.f32 %v241, %v270
    %v366 = vadd.f32 %v365, %v299
    %v367 = vadd.f32 %v366, %v328
    %368 = vadd.xlane.f32.xlu0 %v367
    %v369 = vpop.xlane.xlu0 %368
    %v370 = vrcp.pop 512.0
    %v371 = vmul.f32 512.0, %v370
    %v372 = vsub.f32 1.0, %v371
    %v373 = vmul.f32 %v370, %v372
    %v374 = vadd.f32 %v370, %v373
    %vm375 = vweird.f32 %v370
    %v376 = vsel %vm375, %v370, %v374
    %v377 = vmul.f32 %v334, %v376
    %v378 = vmul.f32 %v339, %v376
    %v379 = vmul.f32 %v344, %v376
    %v380 = vmul.f32 %v349, %v376
    %v381 = vmul.f32 %v354, %v376
    %v382 = vmul.f32 %v359, %v376
    %v383 = vmul.f32 %v364, %v376
    %v384 = vmul.f32 %v369, %v376
    %v385 = vsub.f32 %v224, %v377
    %v386 = vsub.f32 %v253, %v377
    %v387 = vsub.f32 %v282, %v377
    %v388 = vsub.f32 %v311, %v377
    %v389 = vsub.f32 %v226, %v378
    %v390 = vsub.f32 %v255, %v378
    %v391 = vsub.f32 %v284, %v378
    %v392 = vsub.f32 %v313, %v378
    %v393 = vsub.f32 %v229, %v379
    %v394 = vsub.f32 %v258, %v379
    %v395 = vsub.f32 %v287, %v379
    %v396 = vsub.f32 %v316, %v379
    %v397 = vsub.f32 %v231, %v380
    %v398 = vsub.f32 %v260, %v380
    %v399 = vsub.f32 %v289, %v380
    %v400 = vsub.f32 %v318, %v380
    %v401 = vsub.f32 %v234, %v381
    %v402 = vsub.f32 %v263, %v381
    %v403 = vsub.f32 %v292, %v381
    %v404 = vsub.f32 %v321, %v381
    %v405 = vsub.f32 %v236, %v382
    %v406 = vsub.f32 %v265, %v382
    %v407 = vsub.f32 %v294, %v382
    %v408 = vsub.f32 %v323, %v382
    %v409 = vsub.f32 %v239, %v383
    %v410 = vsub.f32 %v268, %v383
    %v411 = vsub.f32 %v297, %v383
    %v412 = vsub.f32 %v326, %v383
    %v413 = vsub.f32 %v241, %v384
    %v414 = vsub.f32 %v270, %v384
    %v415 = vsub.f32 %v299, %v384
    %v416 = vsub.f32 %v328, %v384
    %v417 = vmul.f32 %v385, %v385
    %v418 = vmul.f32 %v386, %v386
    %v419 = vmul.f32 %v387, %v387
    %v420 = vmul.f32 %v388, %v388
    %v421 = vmul.f32 %v389, %v389
    %v422 = vmul.f32 %v390, %v390
    %v423 = vmul.f32 %v391, %v391
    %v424 = vmul.f32 %v392, %v392
    %v425 = vmul.f32 %v393, %v393
    %v426 = vmul.f32 %v394, %v394
    %v427 = vmul.f32 %v395, %v395
    %v428 = vmul.f32 %v396, %v396
    %v429 = vmul.f32 %v397, %v397
    %v430 = vmul.f32 %v398, %v398
    %v431 = vmul.f32 %v399, %v399
    %v432 = vmul.f32 %v400, %v400
    %v433 = vmul.f32 %v401, %v401
    %v434 = vmul.f32 %v402, %v402
    %v435 = vmul.f32 %v403, %v403
    %v436 = vmul.f32 %v404, %v404
    %v437 = vmul.f32 %v405, %v405
    %v438 = vmul.f32 %v406, %v406
    %v439 = vmul.f32 %v407, %v407
    %v440 = vmul.f32 %v408, %v408
    %v441 = vmul.f32 %v409, %v409
    %v442 = vmul.f32 %v410, %v410
    %v443 = vmul.f32 %v411, %v411
    %v444 = vmul.f32 %v412, %v412
    %v445 = vmul.f32 %v413, %v413
    %v446 = vmul.f32 %v414, %v414
    %v447 = vmul.f32 %v415, %v415
    %v448 = vmul.f32 %v416, %v416
    %v449 = vadd.f32 %v417, %v418
    %v450 = vadd.f32 %v449, %v419
    %v451 = vadd.f32 %v450, %v420
    %452 = vadd.xlane.f32.xlu0 %v451
    %v453 = vpop.xlane.xlu0 %452
    %v454 = vadd.f32 %v421, %v422
    %v455 = vadd.f32 %v454, %v423
    %v456 = vadd.f32 %v455, %v424
    %457 = vadd.xlane.f32.xlu0 %v456
    %v458 = vpop.xlane.xlu0 %457
    %v459 = vadd.f32 %v425, %v426
    %v460 = vadd.f32 %v459, %v427
    %v461 = vadd.f32 %v460, %v428
    %462 = vadd.xlane.f32.xlu0 %v461
    %v463 = vpop.xlane.xlu0 %462
    %v464 = vadd.f32 %v429, %v430
    %v465 = vadd.f32 %v464, %v431
    %v466 = vadd.f32 %v465, %v432
    %467 = vadd.xlane.f32.xlu0 %v466
    %v468 = vpop.xlane.xlu0 %467
    %v469 = vadd.f32 %v433, %v434
    %v470 = vadd.f32 %v469, %v435
    %v471 = vadd.f32 %v470, %v436
    %472 = vadd.xlane.f32.xlu0 %v471
    %v473 = vpop.xlane.xlu0 %472
    %v474 = vadd.f32 %v437, %v438
    %v475 = vadd.f32 %v474, %v439
    %v476 = vadd.f32 %v475, %v440
    %477 = vadd.xlane.f32.xlu0 %v476
    %v478 = vpop.xlane.xlu0 %477
    %v479 = vadd.f32 %v441, %v442
    %v480 = vadd.f32 %v479, %v443
    %v481 = vadd.f32 %v480, %v444
    %482 = vadd.xlane.f32.xlu0 %v481
    %v483 = vpop.xlane.xlu0 %482
    %v484 = vadd.f32 %v445, %v446
    %v485 = vadd.f32 %v484, %v447
    %v486 = vadd.f32 %v485, %v448
    %487 = vadd.xlane.f32.xlu0 %v486
    %v488 = vpop.xlane.xlu0 %487
    %v489 = vmul.f32 %v453, %v376
    %v490 = vmul.f32 %v458, %v376
    %v491 = vmul.f32 %v463, %v376
    %v492 = vmul.f32 %v468, %v376
    %v493 = vmul.f32 %v473, %v376
    %v494 = vmul.f32 %v478, %v376
    %v495 = vmul.f32 %v483, %v376
    %v496 = vmul.f32 %v488, %v376
    %v497 = vadd.f32 %v489, 1e-05
    %v498 = vadd.f32 %v490, 1e-05
    %v499 = vadd.f32 %v491, 1e-05
    %v500 = vadd.f32 %v492, 1e-05
    %v501 = vadd.f32 %v493, 1e-05
    %v502 = vadd.f32 %v494, 1e-05
    %v503 = vadd.f32 %v495, 1e-05
    %v504 = vadd.f32 %v496, 1e-05
    %v505 = vrsqrt.pop %v497
    %v506 = vmul.f32 %v505, %v497
    %v507 = vmul.f32 %v506, %v505
    %v508 = vmul.f32 0.5, %v507
    %v509 = vsub.f32 1.5, %v508
    %v510 = vmul.f32 %v505, %v509
    %vm511 = vweird.f32 %v497
    %vm512 = vweird.f32 %v505
    %vm513 = vmor %vm511, %vm512
    %v514 = vsel %vm513, %v505, %v510
    %v515 = vrsqrt.pop %v498
    %v516 = vmul.f32 %v515, %v498
    %v517 = vmul.f32 %v516, %v515
    %v518 = vmul.f32 0.5, %v517
    %v519 = vsub.f32 1.5, %v518
    %v520 = vmul.f32 %v515, %v519
    %vm521 = vweird.f32 %v498
    %vm522 = vweird.f32 %v515
    %vm523 = vmor %vm521, %vm522
    %v524 = vsel %vm523, %v515, %v520
    %v525 = vrsqrt.pop %v499
    %v526 = vmul.f32 %v525, %v499
    %v527 = vmul.f32 %v526, %v525
    %v528 = vmul.f32 0.5, %v527
    %v529 = vsub.f32 1.5, %v528
    %v530 = vmul.f32 %v525, %v529
    %vm531 = vweird.f32 %v499
    %vm532 = vweird.f32 %v525
    %vm533 = vmor %vm531, %vm532
    %v534 = vsel %vm533, %v525, %v530
    %v535 = vrsqrt.pop %v500
    %v536 = vmul.f32 %v535, %v500
    %v537 = vmul.f32 %v536, %v535
    %v538 = vmul.f32 0.5, %v537
    %v539 = vsub.f32 1.5, %v538
    %v540 = vmul.f32 %v535, %v539
    %vm541 = vweird.f32 %v500
    %vm542 = vweird.f32 %v535
    %vm543 = vmor %vm541, %vm542
    %v544 = vsel %vm543, %v535, %v540
    %v545 = vrsqrt.pop %v501
    %v546 = vmul.f32 %v545, %v501
    %v547 = vmul.f32 %v546, %v545
    %v548 = vmul.f32 0.5, %v547
    %v549 = vsub.f32 1.5, %v548
    %v550 = vmul.f32 %v545, %v549
    %vm551 = vweird.f32 %v501
    %vm552 = vweird.f32 %v545
    %vm553 = vmor %vm551, %vm552
    %v554 = vsel %vm553, %v545, %v550
    %v555 = vrsqrt.pop %v502
    %v556 = vmul.f32 %v555, %v502
    %v557 = vmul.f32 %v556, %v555
    %v558 = vmul.f32 0.5, %v557
    %v559 = vsub.f32 1.5, %v558
    %v560 = vmul.f32 %v555, %v559
    %vm561 = vweird.f32 %v502
    %vm562 = vweird.f32 %v555
    %vm563 = vmor %vm561, %vm562
    %v564 = vsel %vm563, %v555, %v560
    %v565 = vrsqrt.pop %v503
    %v566 = vmul.f32 %v565, %v503
    %v567 = vmul.f32 %v566, %v565
    %v568 = vmul.f32 0.5, %v567
    %v569 = vsub.f32 1.5, %v568
    %v570 = vmul.f32 %v565, %v569
    %vm571 = vweird.f32 %v503
    %vm572 = vweird.f32 %v565
    %vm573 = vmor %vm571, %vm572
    %v574 = vsel %vm573, %v565, %v570
    %v575 = vrsqrt.pop %v504
    %v576 = vmul.f32 %v575, %v504
    %v577 = vmul.f32 %v576, %v575
    %v578 = vmul.f32 0.5, %v577
    %v579 = vsub.f32 1.5, %v578
    %v580 = vmul.f32 %v575, %v579
    %vm581 = vweird.f32 %v504
    %vm582 = vweird.f32 %v575
    %vm583 = vmor %vm581, %vm582
    %v584 = vsel %vm583, %v575, %v580
    %v585 = vmul.f32 %v385, %v514
    %v586 = vmul.f32 %v386, %v514
    %v587 = vmul.f32 %v387, %v514
    %v588 = vmul.f32 %v388, %v514
    %v589 = vmul.f32 %v389, %v524
    %v590 = vmul.f32 %v390, %v524
    %v591 = vmul.f32 %v391, %v524
    %v592 = vmul.f32 %v392, %v524
    %v593 = vmul.f32 %v393, %v534
    %v594 = vmul.f32 %v394, %v534
    %v595 = vmul.f32 %v395, %v534
    %v596 = vmul.f32 %v396, %v534
    %v597 = vmul.f32 %v397, %v544
    %v598 = vmul.f32 %v398, %v544
    %v599 = vmul.f32 %v399, %v544
    %v600 = vmul.f32 %v400, %v544
    %v601 = vmul.f32 %v401, %v554
    %v602 = vmul.f32 %v402, %v554
    %v603 = vmul.f32 %v403, %v554
    %v604 = vmul.f32 %v404, %v554
    %v605 = vmul.f32 %v405, %v564
    %v606 = vmul.f32 %v406, %v564
    %v607 = vmul.f32 %v407, %v564
    %v608 = vmul.f32 %v408, %v564
    %v609 = vmul.f32 %v409, %v574
    %v610 = vmul.f32 %v410, %v574
    %v611 = vmul.f32 %v411, %v574
    %v612 = vmul.f32 %v412, %v574
    %v613 = vmul.f32 %v413, %v584
    %v614 = vmul.f32 %v414, %v584
    %v615 = vmul.f32 %v415, %v584
    %v616 = vmul.f32 %v416, %v584
    %v617 = vperm.slane %v61, 1
    %v618 = vperm.slane %v61, 5
    %v619 = vperm.slane %v62, 1
    %v620 = vperm.slane %v62, 5
    %v625 = vperm.slane %v617, 1
    %v626 = vperm.slane %v618, 1
    %v627 = vperm.slane %v619, 1
    %v628 = vperm.slane %v620, 1
    %v629 = vmul.f32 %v585, %v625
    %v630 = vmul.f32 %v586, %v626
    %v631 = vmul.f32 %v587, %v627
    %v632 = vmul.f32 %v588, %v628
    %v633 = vmul.f32 %v589, %v625
    %v634 = vmul.f32 %v590, %v626
    %v635 = vmul.f32 %v591, %v627
    %v636 = vmul.f32 %v592, %v628
    %v637 = vmul.f32 %v593, %v625
    %v638 = vmul.f32 %v594, %v626
    %v639 = vmul.f32 %v595, %v627
    %v640 = vmul.f32 %v596, %v628
    %v641 = vmul.f32 %v597, %v625
    %v642 = vmul.f32 %v598, %v626
    %v643 = vmul.f32 %v599, %v627
    %v644 = vmul.f32 %v600, %v628
    %v645 = vmul.f32 %v601, %v625
    %v646 = vmul.f32 %v602, %v626
    %v647 = vmul.f32 %v603, %v627
    %v648 = vmul.f32 %v604, %v628
    %v649 = vmul.f32 %v605, %v625
    %v650 = vmul.f32 %v606, %v626
    %v651 = vmul.f32 %v607, %v627
    %v652 = vmul.f32 %v608, %v628
    %v653 = vmul.f32 %v609, %v625
    %v654 = vmul.f32 %v610, %v626
    %v655 = vmul.f32 %v611, %v627
    %v656 = vmul.f32 %v612, %v628
    %v657 = vmul.f32 %v613, %v625
    %v658 = vmul.f32 %v614, %v626
    %v659 = vmul.f32 %v615, %v627
    %v660 = vmul.f32 %v616, %v628
    %v661 = vperm.slane %v61, 2
    %v662 = vperm.slane %v61, 6
    %v663 = vperm.slane %v62, 2
    %v664 = vperm.slane %v62, 6
    %v669 = vperm.slane %v661, 2
    %v670 = vperm.slane %v662, 2
    %v671 = vperm.slane %v663, 2
    %v672 = vperm.slane %v664, 2
    %v673 = vadd.f32 %v629, %v669
    %v674 = vadd.f32 %v630, %v670
    %v675 = vadd.f32 %v631, %v671
    %v676 = vadd.f32 %v632, %v672
    %v677 = vadd.f32 %v633, %v669
    %v678 = vadd.f32 %v634, %v670
    %v679 = vadd.f32 %v635, %v671
    %v680 = vadd.f32 %v636, %v672
    %v681 = vadd.f32 %v637, %v669
    %v682 = vadd.f32 %v638, %v670
    %v683 = vadd.f32 %v639, %v671
    %v684 = vadd.f32 %v640, %v672
    %v685 = vadd.f32 %v641, %v669
    %v686 = vadd.f32 %v642, %v670
    %v687 = vadd.f32 %v643, %v671
    %v688 = vadd.f32 %v644, %v672
    %v689 = vadd.f32 %v645, %v669
    %v690 = vadd.f32 %v646, %v670
    %v691 = vadd.f32 %v647, %v671
    %v692 = vadd.f32 %v648, %v672
    %v693 = vadd.f32 %v649, %v669
    %v694 = vadd.f32 %v650, %v670
    %v695 = vadd.f32 %v651, %v671
    %v696 = vadd.f32 %v652, %v672
    %v697 = vadd.f32 %v653, %v669
    %v698 = vadd.f32 %v654, %v670
    %v699 = vadd.f32 %v655, %v671
    %v700 = vadd.f32 %v656, %v672
    %v701 = vadd.f32 %v657, %v669
    %v702 = vadd.f32 %v658, %v670
    %v703 = vadd.f32 %v659, %v671
    %v704 = vadd.f32 %v660, %v672
    %705 = vst [vmem:[#allocation8] sm:$0xff] %v673
    %706 = vst [vmem:[#allocation8 + $0x8] sm:$0xff] %v674
    %707 = vst [vmem:[#allocation8 + $0x10] sm:$0xff] %v675
    %708 = vst [vmem:[#allocation8 + $0x18] sm:$0xff] %v676
    %709 = vst [vmem:[#allocation8 + $0x20] sm:$0xff] %v677
    %710 = vst [vmem:[#allocation8 + $0x28] sm:$0xff] %v678
    %711 = vst [vmem:[#allocation8 + $0x30] sm:$0xff] %v679
    %712 = vst [vmem:[#allocation8 + $0x38] sm:$0xff] %v680
    %713 = vst [vmem:[#allocation8 + $0x40] sm:$0xff] %v681
    %714 = vst [vmem:[#allocation8 + $0x48] sm:$0xff] %v682
    %715 = vst [vmem:[#allocation8 + $0x50] sm:$0xff] %v683
    %716 = vst [vmem:[#allocation8 + $0x58] sm:$0xff] %v684
    %717 = vst [vmem:[#allocation8 + $0x60] sm:$0xff] %v685
    %718 = vst [vmem:[#allocation8 + $0x68] sm:$0xff] %v686
    %719 = vst [vmem:[#allocation8 + $0x70] sm:$0xff] %v687
    %720 = vst [vmem:[#allocation8 + $0x78] sm:$0xff] %v688
    %721 = vst [vmem:[#allocation8 + $0x80] sm:$0xff] %v689
    %722 = vst [vmem:[#allocation8 + $0x88] sm:$0xff] %v690
    %723 = vst [vmem:[#allocation8 + $0x90] sm:$0xff] %v691
    %724 = vst [vmem:[#allocation8 + $0x98] sm:$0xff] %v692
    %725 = vst [vmem:[#allocation8 + $0xa0] sm:$0xff] %v693
    %726 = vst [vmem:[#allocation8 + $0xa8] sm:$0xff] %v694
    %727 = vst [vmem:[#allocation8 + $0xb0] sm:$0xff] %v695
    %728 = vst [vmem:[#allocation8 + $0xb8] sm:$0xff] %v696
    %729 = vst [vmem:[#allocation8 + $0xc0] sm:$0xff] %v697
    %730 = vst [vmem:[#allocation8 + $0xc8] sm:$0xff] %v698
    %731 = vst [vmem:[#allocation8 + $0xd0] sm:$0xff] %v699
    %732 = vst [vmem:[#allocation8 + $0xd8] sm:$0xff] %v700
    %733 = vst [vmem:[#allocation8 + $0xe0] sm:$0xff] %v701
    %734 = vst [vmem:[#allocation8 + $0xe8] sm:$0xff] %v702
    %735 = vst [vmem:[#allocation8 + $0xf0] sm:$0xff] %v703
    %736 = vst [vmem:[#allocation8 + $0xf8] sm:$0xff] %v704
    // Predicated region
    $region26: #{tpu_custom_call.1} parent=1 // pred_check
      _
    $region27: #{tpu_custom_call.1} parent=1 // pred_check_branch
      %738 = sbr.rel (0) target = $region29
    $region28: #{tpu_custom_call.1} parent=1 // pred_region
      %740 = vsyncadd [#allocation4], 0
      %s741 = sshll.u32 [#allocation8], 4
      %s742 = int_to_ptr.vmem [resolvable:$true] %s741
      %s743 = sshll.u32 %s3, 4
      %s744 = int_to_ptr.hbm [resolvable:$true] %s743
      %749 = dma.vmem_to_hbm [thread:$0]  %s742, 4096, %s744, [#allocation4], 512, 512, 32
    $region29: #{tpu_custom_call.1} parent=1 // pred_fallthru
      _
    // Predicated region
    $region30: #{tpu_custom_call.1} parent=1 // pred_check
      _
    $region31: #{tpu_custom_call.1} parent=1 // pred_check_branch
      %751 = sbr.rel (0) target = $region33
    $region32: #{tpu_custom_call.1} parent=1 // pred_region
      %753 = dma.done [#allocation4], 4096
    $region33: #{tpu_custom_call.1} parent=1 // pred_fallthru
      _
    %754 = vsyncpa [#allocation3], 1
    %755 = vsyncpa [#allocation6], 1
    %756 = vsyncpa [#allocation4], 1

</llo_original>
